<compile_context>
chip_gen: v7x
topology: tpu7x:2x2x1
jax: 0.10.0
libtpu: 0.0.40
codegen_flags: <defaults>
</compile_context>

<pallas_src>
import jax
import jax.numpy as jnp
from jax.experimental import pallas as pl
from jax.experimental.pallas import tpu as pltpu

SUBLANE = 8
DEFAULT_TILE_B = 4096     # multiple of 8; upper bound on the batch tile
MIN_GRID_STEPS = 4        # keep >= ~4 steps so both v7x TCs get work
TINY_BATCH = 32           # below this, a single full-array block is simplest


def _round_up(x, m):
    return ((x + m - 1) // m) * m


def precnn_fc_kernel(x_ref, w_ref, b_ref, o_ref):
    # x: (tb, H) ; w: (H, O) ; b: (1, O) ; o: (tb, O)
    acc = jnp.dot(x_ref[...], w_ref[...], preferred_element_type=jnp.float32)
    o_ref[...] = (acc + b_ref[...]).astype(o_ref.dtype)


def precnn_fc(feat, weight, bias, *, tile_b=DEFAULT_TILE_B):
    """feat: (B, H) f32, weight: (H, O) f32, bias: (O,) f32 -> (B, O) f32."""
    B, H = feat.shape
    O = weight.shape[1]
    b2 = bias.reshape(1, O)

    # --- batch tile selection -------------------------------------------
    # Tiny batches: one full-array block (block dims equal full dims, so the
    # (8,128) divisibility rule is trivially satisfied).
    # Larger batches: tile in multiples of 8, capped both by tile_b and by
    # "keep >= MIN_GRID_STEPS grid steps" so v7x's 2 TCs both get work.
    if B <= TINY_BATCH:
        tb = B
    else:
        tb = min(tile_b, _round_up(pl.cdiv(B, MIN_GRID_STEPS), SUBLANE))
        tb = max(tb, SUBLANE)
    grid = (pl.cdiv(B, tb),)

    itemsize = jnp.dtype(feat.dtype).itemsize
    # Per-step VMEM: double-buffered feat tile + double-buffered out tile +
    # resident W and b, plus compiler-scratch headroom; cap under v7x 64 MiB.
    per_step_bytes = (2 * tb * (H + O) + H * O + O) * itemsize
    vmem_limit = int(min(48 * 1024 * 1024, per_step_bytes + 12 * 1024 * 1024))

    cost = pl.CostEstimate(
        flops=2 * B * H * O,
        transcendentals=0,
        bytes_accessed=(B * H + H * O + O + B * O) * itemsize,
    )

    out = pl.pallas_call(
        precnn_fc_kernel,
        out_shape=jax.ShapeDtypeStruct((B, O), feat.dtype),
        grid_spec=pl.GridSpec(
            grid=grid,
            in_specs=[
                pl.BlockSpec((tb, H), lambda i: (i, 0)),   # feat: walk batch
                pl.BlockSpec((H, O), lambda i: (0, 0)),    # weight: resident
                pl.BlockSpec((1, O), lambda i: (0, 0)),    # bias: resident
            ],
            out_specs=pl.BlockSpec((tb, O), lambda i: (i, 0)),
        ),
        compiler_params=pltpu.CompilerParams(
            dimension_semantics=("parallel",),   # no reduction axis
            vmem_limit_bytes=vmem_limit,
        ),
        cost_estimate=cost,
    )(feat, weight, b2)

    return out


class COOLPallas:
    """JAX/Pallas port of COOL (forward pass only; the live pre_cnn branch)."""

    def __init__(self, hdim, nfeat, nhid, dropout, key):
        # Deterministic init mimicking torch Linear's U(-1/sqrt(H), 1/sqrt(H)).
        # Only precnn_fc parameters are live in forward.
        k_w, k_b = jax.random.split(key)
        bound = 1.0 / (hdim ** 0.5)
        self.precnn_w = jax.random.uniform(
            k_w, (hdim, 2), jnp.float32, minval=-bound, maxval=bound)
        self.precnn_b = jax.random.uniform(
            k_b, (2,), jnp.float32, minval=-bound, maxval=bound)
        # TODO(synk): FGraphConvolution stack, conv/fc/fc1/fc2, vnl_cntr,
        # mixfc/coolfc are unreachable (pre_cnn hardcoded True) -> not ported.

    def __call__(self, feat, cntr, att, adj, edge):
        tmp = precnn_fc(feat, self.precnn_w, self.precnn_b)
        return (tmp, tmp, tmp)


if __name__ == "__main__":
    key = jax.random.PRNGKey(0)
    k_model, k_feat, k_cntr, k_att, k_adj, k_edge, k_big = jax.random.split(key, 7)

    # Small, forward-consistent shapes.
    B = 2          # batch
    hdim = 32      # feat hidden dim
    nfeat = 4      # node feature dim (unused branch)
    nhid = [8, 8]  # gc hidden dims (unused branch)
    N = 8          # max neighbor num (unused branch)

    feat = jax.random.normal(k_feat, (B, hdim), jnp.float32)
    cntr = jax.random.normal(k_cntr, (B, 1, 48, 48), jnp.float32)            # unused
    att = jax.random.normal(k_att, (B, N, nfeat), jnp.float32)               # unused
    adj = (jax.random.uniform(k_adj, (B, N, N)) > 0.5).astype(jnp.float32)   # unused
    edge = jax.random.normal(k_edge, (B, N, N, 3), jnp.float32)              # unused

    model = COOLPallas(hdim, nfeat, nhid, dropout=0.5, key=k_model)

    out, out_fur, out_vis = model(feat, cntr, att, adj, edge)
    jax.block_until_ready(out)

    # Pure-JAX reference check (tiny / single-block path).
    ref = feat @ model.precnn_w + model.precnn_b
    assert out.shape == (B, 2)
    assert jnp.allclose(out, ref, atol=1e-5, rtol=1e-5)
    assert jnp.allclose(out_fur, ref, atol=1e-5, rtol=1e-5)
    assert jnp.allclose(out_vis, ref, atol=1e-5, rtol=1e-5)

    # Exercise the tiled grid path with a ragged last block (B not a multiple
    # of the tile or of 8).
    B_big = 1043
    feat_big = jax.random.normal(k_big, (B_big, hdim), jnp.float32)
    out_big = precnn_fc(feat_big, model.precnn_w, model.precnn_b)
    jax.block_until_ready(out_big)
    ref_big = feat_big @ model.precnn_w + model.precnn_b
    assert out_big.shape == (B_big, 2)
    assert jnp.allclose(out_big, ref_big, atol=1e-4, rtol=1e-4)

    print("KERNEL_OK")
</pallas_src>

<mosaic_0001>
module attributes {stable_mosaic.version = 11 : i64} {
  func.func @precnn_fc_kernel(%arg0: i32, %arg1: memref<2x32xf32, #tpu.memory_space<vmem>>, %arg2: memref<32x2xf32, #tpu.memory_space<vmem>>, %arg3: memref<1x2xf32, #tpu.memory_space<vmem>>, %arg4: memref<2x2xf32, #tpu.memory_space<vmem>>) attributes {dimension_semantics = [#tpu.dimension_semantics<parallel>], iteration_bounds = array<i64: 1>, scalar_prefetch = 0 : i64, scratch_operands = 0 : i64, tpu.core_type = #tpu.core_type<tc>, window_params = [{transform_indices = @transform_0, window_bounds = array<i64: 2, 32>}, {pipeline_mode = #tpu.pipeline_mode<synchronous>, transform_indices = @transform_1, window_bounds = array<i64: 32, 2>}, {pipeline_mode = #tpu.pipeline_mode<synchronous>, transform_indices = @transform_2, window_bounds = array<i64: 1, 2>}, {transform_indices = @transform_3, window_bounds = array<i64: 2, 2>}]} {
    %c0 = arith.constant 0 : index
    %c0_0 = arith.constant 0 : index
    %0 = vector.load %arg1[%c0, %c0_0] : memref<2x32xf32, #tpu.memory_space<vmem>>, vector<2x32xf32>
    %c0_1 = arith.constant 0 : index
    %c0_2 = arith.constant 0 : index
    %1 = vector.load %arg2[%c0_1, %c0_2] : memref<32x2xf32, #tpu.memory_space<vmem>>, vector<32x2xf32>
    %cst = arith.constant dense<0.000000e+00> : vector<2x2xf32>
    %2 = tpu.matmul %0, %1, %cst {dimension_numbers = #tpu.dot_dimension_numbers<[1], [0], [0], [1], [0, 0, 1, 1], [], []>} : vector<2x32xf32>, vector<32x2xf32>, vector<2x2xf32> -> vector<2x2xf32>
    %c0_3 = arith.constant 0 : index
    %c0_4 = arith.constant 0 : index
    %3 = vector.load %arg3[%c0_3, %c0_4] : memref<1x2xf32, #tpu.memory_space<vmem>>, vector<1x2xf32>
    %4 = vector.broadcast %3 : vector<1x2xf32> to vector<2x2xf32>
    %5 = arith.addf %2, %4 : vector<2x2xf32>
    %c0_5 = arith.constant 0 : index
    %c0_6 = arith.constant 0 : index
    %6 = vector.load %arg4[%c0_5, %c0_6] : memref<2x2xf32, #tpu.memory_space<vmem>>, vector<2x2xf32>
    tpu.vector_store %arg4[%c0_5, %c0_6], %5 {strides = array<i32>} : memref<2x2xf32, #tpu.memory_space<vmem>>, vector<2x2xf32>,
    return
  }
  func.func @transform_0(%arg0: i32) -> (i32, i32) {
    %c0_i32 = arith.constant 0 : i32
    %c0_i32_0 = arith.constant 0 : i32
    return %arg0, %c0_i32 : i32, i32
  }
  func.func @transform_1(%arg0: i32) -> (i32, i32) {
    %c0_i32 = arith.constant 0 : i32
    %c0_i32_0 = arith.constant 0 : i32
    %c0_i32_1 = arith.constant 0 : i32
    return %c0_i32, %c0_i32_0 : i32, i32
  }
  func.func @transform_2(%arg0: i32) -> (i32, i32) {
    %c0_i32 = arith.constant 0 : i32
    %c0_i32_0 = arith.constant 0 : i32
    %c0_i32_1 = arith.constant 0 : i32
    return %c0_i32, %c0_i32_0 : i32, i32
  }
  func.func @transform_3(%arg0: i32) -> (i32, i32) {
    %c0_i32 = arith.constant 0 : i32
    %c0_i32_0 = arith.constant 0 : i32
    return %arg0, %c0_i32 : i32, i32
  }
}

</mosaic_0001>

<llo_original>
// kernel: tpu_custom_call.1
$region0: #{tpu_custom_call.1}
  #allocation0 [shape = 'u32[]', space=smem, size = 0x4, offset = 0x4, fixed_abs, tag = 'smem constant byte address 0x4 - core index']
  #allocation1 [shape = 'u32[144,128]{1,0:T(1,128)}', space=vmem, size = 0x12000, scoped, tag = 'internal scratch']
  %s0 = inlined_call_operand.vmem [shape: f32[2,32], index: 0, kind: input, shape index: {}]
  %s1 = inlined_call_operand.vmem [shape: f32[32,2], index: 1, kind: input, shape index: {}]
  %s2 = inlined_call_operand.vmem [shape: f32[1,2], index: 2, kind: input, shape index: {}]
  %s3 = inlined_call_operand.hbm [shape: f32[2,2], index: 3, kind: output, shape index: {}]
  %s4 = sld [smem:[#allocation0]]
  $region22: #{tpu_custom_call.1} parent=0
    _
  %s6 = ssub.s32 1, %s4
  %s7 = scalar_select 0, %s6, %s4
  $region1: #{tpu_custom_call.1} parent=0
    #allocation2 [shape = 'u8[1024]{0}', space=vmem, size = 0x400, scoped, tag = 'output window, operand 0, single buffered']
    #allocation3 [shape = 's32[1]{0}', space=sflag, size = 0x4, scoped, tag = 'scoped memory for tpu_custom_call.1']
    %8 = vsyncpa [#allocation3], 0
    // Predicated region
    $region2: #{tpu_custom_call.1} parent=1 // pred_check
      _
    $region3: #{tpu_custom_call.1} parent=1 // pred_check_branch
      %10 = sbr.rel (0) target = $region5
    $region4: #{tpu_custom_call.1} parent=1 // pred_region
      _
    $region5: #{tpu_custom_call.1} parent=1 // pred_fallthru
      _
    // Predicated region
    $region6: #{tpu_custom_call.1} parent=1 // pred_check
      _
    $region7: #{tpu_custom_call.1} parent=1 // pred_check_branch
      %12 = sbr.rel (0) target = $region9
    $region8: #{tpu_custom_call.1} parent=1 // pred_region
      _
    $region9: #{tpu_custom_call.1} parent=1 // pred_fallthru
      _
    // Predicated region
    $region10: #{tpu_custom_call.1} parent=1 // pred_check
      _
    $region11: #{tpu_custom_call.1} parent=1 // pred_check_branch
      %14 = sbr.rel (0) target = $region13
    $region12: #{tpu_custom_call.1} parent=1 // pred_region
      _
    $region13: #{tpu_custom_call.1} parent=1 // pred_fallthru
      _
    %v15 = vld [vmem:[%s0] sm:$0x3]
    %v16 = vld [vmem:[%s1] sm:$0xff]
    %v17 = vld [vmem:[%s1 + $0x8] sm:$0xff]
    %v18 = vld [vmem:[%s1 + $0x10] sm:$0xff]
    %v19 = vld [vmem:[%s1 + $0x18] sm:$0xff]
    %v20 = vld [vmem:[%s2] sm:$0x1]
    %v22 = vlaneseq
    %v23 = vshrl.u32 %v22, 7
    %v24 = vsub.s32 0, %v23
    %v25 = vrot.slane %v20, %v24
    %vm27 = vcmask 261120
    %v29 = vsel %vm27, %v15, 0
    %31 = vmatprep.subr.mxu0 0.0
    %32 = vmatpush1.msra.mxu0 %v16
    %33 = vmatprep.subr.mxu0 0.0
    %34 = vmatpush1.msra.mxu0 %v17
    %35 = vmatprep.subr.mxu0 0.0
    %36 = vmatpush1.msra.mxu0 %v18
    %37 = vmatprep.subr.mxu0 0.0
    %38 = vmatpush1.msra.mxu0 %v19
    %39 = vmatprep.subr.mxu0 0.0
    %40 = vmatpush1.msra.mxu0 0.0
    %41 = vmatprep.subr.mxu0 0.0
    %42 = vmatpush1.msra.mxu0 0.0
    %43 = vmatprep.subr.mxu0 0.0
    %44 = vmatpush1.msra.mxu0 0.0
    %45 = vmatprep.subr.mxu0 0.0
    %46 = vmatpush1.msra.mxu0 0.0
    %47 = vmatprep.subr.mxu0 0.0
    %48 = vmatpush1.msra.mxu0 0.0
    %49 = vmatprep.subr.mxu0 0.0
    %50 = vmatpush1.msra.mxu0 0.0
    %51 = vmatprep.subr.mxu0 0.0
    %52 = vmatpush1.msra.mxu0 0.0
    %53 = vmatprep.subr.mxu0 0.0
    %54 = vmatpush1.msra.mxu0 0.0
    %55 = vmatprep.subr.mxu0 0.0
    %56 = vmatpush1.msra.mxu0 0.0
    %57 = vmatprep.subr.mxu0 0.0
    %58 = vmatpush1.msra.mxu0 0.0
    %59 = vmatprep.subr.mxu0 0.0
    %60 = vmatpush1.msra.mxu0 0.0
    %61 = vmatprep.subr.mxu0 0.0
    %62 = vmatpush1.msra.mxu0 0.0
    %63 = vmatprep.subr.mxu0 0.0
    %64 = vmatpush1.msra.mxu0 0.0
    %65 = vmatprep.subr.mxu0 0.0
    %66 = vmatpush1.msra.mxu0 0.0
    %67 = vmatprep.subr.mxu0 0.0
    %68 = vmatpush1.msra.mxu0 0.0
    %69 = vmatprep.subr.mxu0 0.0
    %70 = vmatpush1.msra.mxu0 0.0
    %71 = vmatprep.subr.mxu0 0.0
    %72 = vmatpush1.msra.mxu0 0.0
    %73 = vmatprep.subr.mxu0 0.0
    %74 = vmatpush1.msra.mxu0 0.0
    %75 = vmatprep.subr.mxu0 0.0
    %76 = vmatpush1.msra.mxu0 0.0
    %77 = vmatprep.subr.mxu0 0.0
    %78 = vmatpush1.msra.mxu0 0.0
    %79 = vmatprep.subr.mxu0 0.0
    %80 = vmatpush1.msra.mxu0 0.0
    %81 = vmatprep.subr.mxu0 0.0
    %82 = vmatpush1.msra.mxu0 0.0
    %83 = vmatprep.subr.mxu0 0.0
    %84 = vmatpush1.msra.mxu0 0.0
    %85 = vmatprep.subr.mxu0 0.0
    %86 = vmatpush1.msra.mxu0 0.0
    %87 = vmatprep.subr.mxu0 0.0
    %88 = vmatpush1.msra.mxu0 0.0
    %89 = vmatprep.subr.mxu0 0.0
    %90 = vmatpush1.msra.mxu0 0.0
    %91 = vmatprep.subr.mxu0 0.0
    %92 = vmatpush1.msra.mxu0 0.0
    %93 = vmatprep.subr.mxu0 0.0
    %94 = vmatpush1.msra.mxu0 0.0
    %95 = vmatprep.mubr.f32.mxu0 0.0
    %96 = vmatmul.mubr.f32.gmra.mrb[0].mxu0 %v29
    %v97 = vpop.f32.mrb[0].mxu0
    %v98 = vadd.f32 %v25, %v97
    %v99 = vpop.f32.mrb[0].mxu0
    %100 = vdwg.mxu0
    %vm101 = vcmask 9216
    %102 = vst.msk [vmem:[#allocation2] sm:$0x3] %vm101, %v98
    // Predicated region
    $region14: #{tpu_custom_call.1} parent=1 // pred_check
      _
    $region15: #{tpu_custom_call.1} parent=1 // pred_check_branch
      %104 = sbr.rel (0) target = $region17
    $region16: #{tpu_custom_call.1} parent=1 // pred_region
      %s106 = ssub.s32 32, 32
      %107 = vsyncadd [#allocation3], %s106
      %s109 = sshll.u32 [#allocation2], 4
      %s110 = int_to_ptr.vmem [resolvable:$true] %s109
      %112 = dma.vmem_to_hbm [thread:$0]  %s110, 32, %s3, [#allocation3]
    $region17: #{tpu_custom_call.1} parent=1 // pred_fallthru
      _
    // Predicated region
    $region18: #{tpu_custom_call.1} parent=1 // pred_check
      _
    $region19: #{tpu_custom_call.1} parent=1 // pred_check_branch
      %114 = sbr.rel (0) target = $region21
    $region20: #{tpu_custom_call.1} parent=1 // pred_region
      %115 = dma.done [#allocation3], 32
    $region21: #{tpu_custom_call.1} parent=1 // pred_fallthru
      _
    %116 = vsyncpa [#allocation3], 1

</llo_original>
